<compile_context>
chip_gen: v7x
topology: tpu7x:2x2x1
jax: 0.10.0
libtpu: 0.0.40
codegen_flags: <defaults>
</compile_context>

<pallas_src>
import functools

import jax
import jax.numpy as jnp
from jax.experimental import pallas as pl
from jax.experimental.pallas import tpu as pltpu

LN_EPS = 1e-5
LANES = 128


def _round_up(x, m):
    return (x + m - 1) // m * m


def _masked_layernorm(h, gamma, beta, n_true):
    # h has padded lanes that are exactly zero; gamma/beta are zero there too,
    # so the output's padded lanes stay zero.  Stats use the true width n_true.
    lane = jax.lax.broadcasted_iota(jnp.int32, h.shape, dimension=1)
    mask = lane < n_true
    inv_n = jnp.float32(1.0 / n_true)
    mu = jnp.sum(h, axis=-1, keepdims=True) * inv_n        # padded lanes add 0
    diff = jnp.where(mask, h - mu, 0.0)
    var = jnp.sum(diff * diff, axis=-1, keepdims=True) * inv_n
    return diff * jax.lax.rsqrt(var + LN_EPS) * gamma + beta


def _critic_kernel(xin_ref, w_ref, vec_ref, out_ref, *, d_in, d_pad, lay1, lay2):
    x = xin_ref[...]                      # (B_tile, d_pad) f32
    w1 = w_ref[:d_pad, :]                 # (d_pad, 128)
    w2 = w_ref[d_pad:, :]                 # (128, 128)

    b1, g1, be1 = vec_ref[0:1, :], vec_ref[1:2, :], vec_ref[2:3, :]
    b2, g2, be2 = vec_ref[3:4, :], vec_ref[4:5, :], vec_ref[5:6, :]
    w3, b3 = vec_ref[6:7, :], vec_ref[7:8, :]
    wq, bq = vec_ref[8:9, :], vec_ref[9:10, :]

    # fc1 -> LayerNorm -> relu   (MXU matmul, padded lanes stay zero)
    h = jnp.dot(x, w1, preferred_element_type=jnp.float32) + b1
    h = jnp.maximum(_masked_layernorm(h, g1, be1, lay1), 0.0)

    # fc2 -> LayerNorm
    sv = jnp.dot(h, w2, preferred_element_type=jnp.float32) + b2
    sv = _masked_layernorm(sv, g2, be2, lay2)

    # fc3(action) -> relu : K=1 matmul replaced by VPU broadcast multiply.
    a = x[:, d_in:d_in + 1]               # action column, (B_tile, 1)
    av = jnp.maximum(a * w3 + b3, 0.0)

    # add -> relu -> q : N=1 matmul replaced by lane reduction (XLU).
    sa = jnp.maximum(sv + av, 0.0)
    q = jnp.sum(sa * wq, axis=-1, keepdims=True) + bq      # (B_tile, 128) dense
    out_ref[...] = q.astype(out_ref.dtype)


def critic_forward(state, action, params, *, b_tile=None):
    B, d_in = state.shape
    lay1 = params["w1"].shape[1]
    lay2 = params["w2"].shape[1]
    d_pad = _round_up(d_in + 1, LANES)    # +1 lane holds the action scalar

    if b_tile is None:
        b_tile = min(128, _round_up(max(B, 1), 8))   # small batches: one 8-row tile
    b_pad = _round_up(B, b_tile)
    n_tiles = b_pad // b_tile

    # ---- pack inputs on the host (layout plumbing, not compute) ----
    xin = jnp.zeros((b_pad, d_pad), jnp.float32)
    xin = xin.at[:B, :d_in].set(state.astype(jnp.float32))
    xin = xin.at[:B, d_in:d_in + 1].set(action.astype(jnp.float32))

    w_slab = jnp.zeros((d_pad + LANES, LANES), jnp.float32)
    w_slab = w_slab.at[:d_in, :lay1].set(params["w1"].astype(jnp.float32))
    w_slab = w_slab.at[d_pad:d_pad + lay1, :lay2].set(params["w2"].astype(jnp.float32))

    vec = jnp.zeros((16, LANES), jnp.float32)
    vec = vec.at[0, :lay1].set(params["b1"].reshape(-1))
    vec = vec.at[1, :lay1].set(params["g1"].reshape(-1))
    vec = vec.at[2, :lay1].set(params["be1"].reshape(-1))
    vec = vec.at[3, :lay2].set(params["b2"].reshape(-1))
    vec = vec.at[4, :lay2].set(params["g2"].reshape(-1))
    vec = vec.at[5, :lay2].set(params["be2"].reshape(-1))
    vec = vec.at[6, :lay2].set(params["w3"].reshape(-1))
    vec = vec.at[7, :lay2].set(params["b3"].reshape(-1))
    vec = vec.at[8, :lay2].set(params["wq"].reshape(-1))
    vec = vec.at[9, :].set(params["bq"].reshape(()))       # bq broadcast over lanes

    kernel = functools.partial(
        _critic_kernel, d_in=d_in, d_pad=d_pad, lay1=lay1, lay2=lay2)

    flops = 2 * b_pad * (d_pad * LANES + LANES * LANES) + 12 * b_pad * LANES
    bytes_accessed = 4 * (xin.size + w_slab.size + vec.size + b_pad * LANES)
    cost = pl.CostEstimate(flops=flops, transcendentals=2 * b_pad,
                           bytes_accessed=bytes_accessed)

    out = pl.pallas_call(
        kernel,
        out_shape=jax.ShapeDtypeStruct((b_pad, LANES), jnp.float32),
        grid_spec=pltpu.PrefetchScalarGridSpec(
            num_scalar_prefetch=0,
            grid=(n_tiles,),
            in_specs=[
                pl.BlockSpec((b_tile, d_pad), lambda i: (i, 0)),       # batch-tiled
                pl.BlockSpec((d_pad + LANES, LANES), lambda i: (0, 0)),  # resident
                pl.BlockSpec((16, LANES), lambda i: (0, 0)),             # resident
            ],
            out_specs=pl.BlockSpec((b_tile, LANES), lambda i: (i, 0)),
        ),
        compiler_params=pltpu.CompilerParams(
            dimension_semantics=("parallel",),   # free 2x on v7x megacore
        ),
        cost_estimate=cost,
    )(xin, w_slab, vec)

    return out[:B, :1]


# ----------------------------------------------------------------------------
# Host-side init (mirrors the module's explicit uniform init ranges) and a
# pure-JAX reference for the correctness check.
# ----------------------------------------------------------------------------
def init_params(key, input_dim, lay1=32, lay2=64):
    ks = jax.random.split(key, 8)
    f1 = 1.0 / jnp.sqrt(jnp.float32(lay1))   # module uses weight.size()[0] = out_features
    f2 = 1.0 / jnp.sqrt(jnp.float32(lay2))
    f3 = 1.0                                  # fc3 keeps PyTorch default: 1/sqrt(in=1)
    fq = 0.003

    def u(k, shape, lim):
        return jax.random.uniform(k, shape, jnp.float32, -lim, lim)

    return {
        "w1": u(ks[0], (input_dim, lay1), f1),
        "b1": u(ks[1], (1, lay1), f1),
        "g1": jnp.ones((1, lay1), jnp.float32),
        "be1": jnp.zeros((1, lay1), jnp.float32),
        "w2": u(ks[2], (lay1, lay2), f2),
        "b2": u(ks[3], (1, lay2), f2),
        "g2": jnp.ones((1, lay2), jnp.float32),
        "be2": jnp.zeros((1, lay2), jnp.float32),
        "w3": u(ks[4], (1, lay2), f3),
        "b3": u(ks[5], (1, lay2), f3),
        "wq": u(ks[6], (lay2, 1), fq),
        "bq": u(ks[7], (1, 1), fq),
    }


def critic_reference(state, action, p):
    def ln(x, g, b):
        mu = jnp.mean(x, axis=-1, keepdims=True)
        var = jnp.mean((x - mu) ** 2, axis=-1, keepdims=True)
        return (x - mu) * jax.lax.rsqrt(var + LN_EPS) * g + b

    h = jnp.maximum(ln(state @ p["w1"] + p["b1"], p["g1"], p["be1"]), 0.0)
    sv = ln(h @ p["w2"] + p["b2"], p["g2"], p["be2"])
    av = jnp.maximum(action @ p["w3"] + p["b3"], 0.0)
    sa = jnp.maximum(sv + av, 0.0)
    return sa @ p["wq"] + p["bq"]


if __name__ == "__main__":
    key = jax.random.PRNGKey(0)
    k_state, k_action, k_params = jax.random.split(key, 3)

    B, D_IN = 2, 8
    state = jax.random.normal(k_state, (B, D_IN), jnp.float32)
    action = jax.random.normal(k_action, (B, 1), jnp.float32)
    params = init_params(k_params, D_IN)

    q = jax.block_until_ready(critic_forward(state, action, params))
    q_ref = critic_reference(state, action, params)

    assert q.shape == (B, 1)
    assert jnp.allclose(q, q_ref, atol=1e-4, rtol=1e-4), (q, q_ref)
    print("KERNEL_OK")
</pallas_src>

<mosaic_0001>
module attributes {stable_mosaic.version = 11 : i64} {
  func.func @_critic_kernel(%arg0: i32, %arg1: memref<8x128xf32, #tpu.memory_space<vmem>>, %arg2: memref<256x128xf32, #tpu.memory_space<vmem>>, %arg3: memref<16x128xf32, #tpu.memory_space<vmem>>, %arg4: memref<8x128xf32, #tpu.memory_space<vmem>>) attributes {dimension_semantics = [#tpu.dimension_semantics<parallel>], iteration_bounds = array<i64: 1>, scalar_prefetch = 0 : i64, scratch_operands = 0 : i64, tpu.core_type = #tpu.core_type<tc>, window_params = [{transform_indices = @transform_0, window_bounds = array<i64: 8, 128>}, {pipeline_mode = #tpu.pipeline_mode<synchronous>, transform_indices = @transform_1, window_bounds = array<i64: 256, 128>}, {pipeline_mode = #tpu.pipeline_mode<synchronous>, transform_indices = @transform_2, window_bounds = array<i64: 16, 128>}, {transform_indices = @transform_3, window_bounds = array<i64: 8, 128>}]} {
    %c0 = arith.constant 0 : index
    %c0_0 = arith.constant 0 : index
    %0 = vector.load %arg1[%c0, %c0_0] : memref<8x128xf32, #tpu.memory_space<vmem>>, vector<8x128xf32>
    %c0_1 = arith.constant 0 : index
    %c0_2 = arith.constant 0 : index
    %1 = vector.load %arg2[%c0_1, %c0_2] : memref<256x128xf32, #tpu.memory_space<vmem>>, vector<128x128xf32>
    %c128 = arith.constant 128 : index
    %c0_3 = arith.constant 0 : index
    %2 = vector.load %arg2[%c128, %c0_3] : memref<256x128xf32, #tpu.memory_space<vmem>>, vector<128x128xf32>
    %c0_4 = arith.constant 0 : index
    %c0_5 = arith.constant 0 : index
    %3 = vector.load %arg3[%c0_4, %c0_5] : memref<16x128xf32, #tpu.memory_space<vmem>>, vector<1x128xf32>
    %c1 = arith.constant 1 : index
    %c0_6 = arith.constant 0 : index
    %4 = vector.load %arg3[%c1, %c0_6] : memref<16x128xf32, #tpu.memory_space<vmem>>, vector<1x128xf32>
    %c2 = arith.constant 2 : index
    %c0_7 = arith.constant 0 : index
    %5 = vector.load %arg3[%c2, %c0_7] : memref<16x128xf32, #tpu.memory_space<vmem>>, vector<1x128xf32>
    %c3 = arith.constant 3 : index
    %c0_8 = arith.constant 0 : index
    %6 = vector.load %arg3[%c3, %c0_8] : memref<16x128xf32, #tpu.memory_space<vmem>>, vector<1x128xf32>
    %c4 = arith.constant 4 : index
    %c0_9 = arith.constant 0 : index
    %7 = vector.load %arg3[%c4, %c0_9] : memref<16x128xf32, #tpu.memory_space<vmem>>, vector<1x128xf32>
    %c5 = arith.constant 5 : index
    %c0_10 = arith.constant 0 : index
    %8 = vector.load %arg3[%c5, %c0_10] : memref<16x128xf32, #tpu.memory_space<vmem>>, vector<1x128xf32>
    %c6 = arith.constant 6 : index
    %c0_11 = arith.constant 0 : index
    %9 = vector.load %arg3[%c6, %c0_11] : memref<16x128xf32, #tpu.memory_space<vmem>>, vector<1x128xf32>
    %c7 = arith.constant 7 : index
    %c0_12 = arith.constant 0 : index
    %10 = vector.load %arg3[%c7, %c0_12] : memref<16x128xf32, #tpu.memory_space<vmem>>, vector<1x128xf32>
    %c8 = arith.constant 8 : index
    %c0_13 = arith.constant 0 : index
    %11 = vector.load %arg3[%c8, %c0_13] : memref<16x128xf32, #tpu.memory_space<vmem>>, vector<1x128xf32>
    %c9 = arith.constant 9 : index
    %c0_14 = arith.constant 0 : index
    %12 = vector.load %arg3[%c9, %c0_14] : memref<16x128xf32, #tpu.memory_space<vmem>>, vector<1x128xf32>
    %cst = arith.constant dense<0.000000e+00> : vector<8x128xf32>
    %13 = tpu.matmul %0, %1, %cst {dimension_numbers = #tpu.dot_dimension_numbers<[1], [0], [0], [1], [0, 0, 1, 1], [], []>} : vector<8x128xf32>, vector<128x128xf32>, vector<8x128xf32> -> vector<8x128xf32>
    %14 = vector.broadcast %3 : vector<1x128xf32> to vector<8x128xf32>
    %15 = arith.addf %13, %14 : vector<8x128xf32>
    %16 = tpu.iota {dimensions = array<i32: 1>} : vector<8x128xi32>
    %c32_i32 = arith.constant 32 : i32
    %17 = vector.broadcast %c32_i32 : i32 to vector<8x128xi32>
    %18 = arith.cmpi slt, %16, %17 : vector<8x128xi32>
    %cst_15 = arith.constant dense<0.000000e+00> : vector<8xf32>
    %19 = vector.multi_reduction <add>, %15, %cst_15 [1] : vector<8x128xf32> to vector<8xf32>
    %20 = vector.shape_cast %19 : vector<8xf32> to vector<8x1xf32>
    %cst_16 = arith.constant 3.125000e-02 : f32
    %21 = vector.broadcast %cst_16 : f32 to vector<8x1xf32>
    %22 = arith.mulf %20, %21 : vector<8x1xf32>
    %23 = vector.broadcast %22 : vector<8x1xf32> to vector<8x128xf32>
    %24 = arith.subf %15, %23 : vector<8x128xf32>
    %cst_17 = arith.constant 0.000000e+00 : f32
    %25 = vector.broadcast %cst_17 : f32 to vector<8x128xf32>
    %26 = arith.select %18, %24, %25 : vector<8x128xi1>, vector<8x128xf32>
    %27 = arith.mulf %26, %26 : vector<8x128xf32>
    %cst_18 = arith.constant dense<0.000000e+00> : vector<8xf32>
    %28 = vector.multi_reduction <add>, %27, %cst_18 [1] : vector<8x128xf32> to vector<8xf32>
    %29 = vector.shape_cast %28 : vector<8xf32> to vector<8x1xf32>
    %cst_19 = arith.constant 3.125000e-02 : f32
    %30 = vector.broadcast %cst_19 : f32 to vector<8x1xf32>
    %31 = arith.mulf %29, %30 : vector<8x1xf32>
    %cst_20 = arith.constant 9.99999974E-6 : f32
    %32 = vector.broadcast %cst_20 : f32 to vector<8x1xf32>
    %33 = arith.addf %31, %32 : vector<8x1xf32>
    %34 = math.rsqrt %33 : vector<8x1xf32>
    %35 = vector.broadcast %34 : vector<8x1xf32> to vector<8x128xf32>
    %36 = arith.mulf %26, %35 : vector<8x128xf32>
    %37 = vector.broadcast %4 : vector<1x128xf32> to vector<8x128xf32>
    %38 = arith.mulf %36, %37 : vector<8x128xf32>
    %39 = vector.broadcast %5 : vector<1x128xf32> to vector<8x128xf32>
    %40 = arith.addf %38, %39 : vector<8x128xf32>
    %cst_21 = arith.constant 0.000000e+00 : f32
    %41 = vector.broadcast %cst_21 : f32 to vector<8x128xf32>
    %42 = arith.maximumf %40, %41 : vector<8x128xf32>
    %cst_22 = arith.constant dense<0.000000e+00> : vector<8x128xf32>
    %43 = tpu.matmul %42, %2, %cst_22 {dimension_numbers = #tpu.dot_dimension_numbers<[1], [0], [0], [1], [0, 0, 1, 1], [], []>} : vector<8x128xf32>, vector<128x128xf32>, vector<8x128xf32> -> vector<8x128xf32>
    %44 = vector.broadcast %6 : vector<1x128xf32> to vector<8x128xf32>
    %45 = arith.addf %43, %44 : vector<8x128xf32>
    %46 = tpu.iota {dimensions = array<i32: 1>} : vector<8x128xi32>
    %c64_i32 = arith.constant 64 : i32
    %47 = vector.broadcast %c64_i32 : i32 to vector<8x128xi32>
    %48 = arith.cmpi slt, %46, %47 : vector<8x128xi32>
    %cst_23 = arith.constant dense<0.000000e+00> : vector<8xf32>
    %49 = vector.multi_reduction <add>, %45, %cst_23 [1] : vector<8x128xf32> to vector<8xf32>
    %50 = vector.shape_cast %49 : vector<8xf32> to vector<8x1xf32>
    %cst_24 = arith.constant 1.562500e-02 : f32
    %51 = vector.broadcast %cst_24 : f32 to vector<8x1xf32>
    %52 = arith.mulf %50, %51 : vector<8x1xf32>
    %53 = vector.broadcast %52 : vector<8x1xf32> to vector<8x128xf32>
    %54 = arith.subf %45, %53 : vector<8x128xf32>
    %cst_25 = arith.constant 0.000000e+00 : f32
    %55 = vector.broadcast %cst_25 : f32 to vector<8x128xf32>
    %56 = arith.select %48, %54, %55 : vector<8x128xi1>, vector<8x128xf32>
    %57 = arith.mulf %56, %56 : vector<8x128xf32>
    %cst_26 = arith.constant dense<0.000000e+00> : vector<8xf32>
    %58 = vector.multi_reduction <add>, %57, %cst_26 [1] : vector<8x128xf32> to vector<8xf32>
    %59 = vector.shape_cast %58 : vector<8xf32> to vector<8x1xf32>
    %cst_27 = arith.constant 1.562500e-02 : f32
    %60 = vector.broadcast %cst_27 : f32 to vector<8x1xf32>
    %61 = arith.mulf %59, %60 : vector<8x1xf32>
    %cst_28 = arith.constant 9.99999974E-6 : f32
    %62 = vector.broadcast %cst_28 : f32 to vector<8x1xf32>
    %63 = arith.addf %61, %62 : vector<8x1xf32>
    %64 = math.rsqrt %63 : vector<8x1xf32>
    %65 = vector.broadcast %64 : vector<8x1xf32> to vector<8x128xf32>
    %66 = arith.mulf %56, %65 : vector<8x128xf32>
    %67 = vector.broadcast %7 : vector<1x128xf32> to vector<8x128xf32>
    %68 = arith.mulf %66, %67 : vector<8x128xf32>
    %69 = vector.broadcast %8 : vector<1x128xf32> to vector<8x128xf32>
    %70 = arith.addf %68, %69 : vector<8x128xf32>
    %71 = vector.extract_strided_slice %0 {offsets = [0, 8], sizes = [8, 1], strides = [1, 1]} : vector<8x128xf32> to vector<8x1xf32>
    %72 = vector.broadcast %71 : vector<8x1xf32> to vector<8x128xf32>
    %73 = vector.broadcast %9 : vector<1x128xf32> to vector<8x128xf32>
    %74 = arith.mulf %72, %73 : vector<8x128xf32>
    %75 = vector.broadcast %10 : vector<1x128xf32> to vector<8x128xf32>
    %76 = arith.addf %74, %75 : vector<8x128xf32>
    %cst_29 = arith.constant 0.000000e+00 : f32
    %77 = vector.broadcast %cst_29 : f32 to vector<8x128xf32>
    %78 = arith.maximumf %76, %77 : vector<8x128xf32>
    %79 = arith.addf %70, %78 : vector<8x128xf32>
    %cst_30 = arith.constant 0.000000e+00 : f32
    %80 = vector.broadcast %cst_30 : f32 to vector<8x128xf32>
    %81 = arith.maximumf %79, %80 : vector<8x128xf32>
    %82 = vector.broadcast %11 : vector<1x128xf32> to vector<8x128xf32>
    %83 = arith.mulf %81, %82 : vector<8x128xf32>
    %cst_31 = arith.constant dense<0.000000e+00> : vector<8xf32>
    %84 = vector.multi_reduction <add>, %83, %cst_31 [1] : vector<8x128xf32> to vector<8xf32>
    %85 = vector.shape_cast %84 : vector<8xf32> to vector<8x1xf32>
    %86 = vector.broadcast %85 : vector<8x1xf32> to vector<8x128xf32>
    %87 = vector.broadcast %12 : vector<1x128xf32> to vector<8x128xf32>
    %88 = arith.addf %86, %87 : vector<8x128xf32>
    %c0_32 = arith.constant 0 : index
    %c0_33 = arith.constant 0 : index
    %89 = vector.load %arg4[%c0_32, %c0_33] : memref<8x128xf32, #tpu.memory_space<vmem>>, vector<8x128xf32>
    tpu.vector_store %arg4[%c0_32, %c0_33], %88 {strides = array<i32>} : memref<8x128xf32, #tpu.memory_space<vmem>>, vector<8x128xf32>,
    return
  }
  func.func @transform_0(%arg0: i32) -> (i32, i32) {
    %c0_i32 = arith.constant 0 : i32
    %c0_i32_0 = arith.constant 0 : i32
    return %arg0, %c0_i32 : i32, i32
  }
  func.func @transform_1(%arg0: i32) -> (i32, i32) {
    %c0_i32 = arith.constant 0 : i32
    %c0_i32_0 = arith.constant 0 : i32
    %c0_i32_1 = arith.constant 0 : i32
    return %c0_i32, %c0_i32_0 : i32, i32
  }
  func.func @transform_2(%arg0: i32) -> (i32, i32) {
    %c0_i32 = arith.constant 0 : i32
    %c0_i32_0 = arith.constant 0 : i32
    %c0_i32_1 = arith.constant 0 : i32
    return %c0_i32, %c0_i32_0 : i32, i32
  }
  func.func @transform_3(%arg0: i32) -> (i32, i32) {
    %c0_i32 = arith.constant 0 : i32
    %c0_i32_0 = arith.constant 0 : i32
    return %arg0, %c0_i32 : i32, i32
  }
}

</mosaic_0001>

<llo_original>
// kernel: tpu_custom_call.1
$region0: #{tpu_custom_call.1}
  #allocation0 [shape = 'u32[]', space=smem, size = 0x4, offset = 0x4, fixed_abs, tag = 'smem constant byte address 0x4 - core index']
  #allocation1 [shape = 'u32[144,128]{1,0:T(1,128)}', space=vmem, size = 0x12000, scoped, tag = 'internal scratch']
  %s0 = inlined_call_operand.hbm [shape: f32[8,128], index: 0, kind: input, shape index: {}]
  %s1 = inlined_call_operand.hbm [shape: f32[256,128], index: 1, kind: input, shape index: {}]
  %s2 = inlined_call_operand.hbm [shape: f32[16,128], index: 2, kind: input, shape index: {}]
  %s3 = inlined_call_operand.hbm [shape: f32[8,128], index: 3, kind: output, shape index: {}]
  %s4 = sld [smem:[#allocation0]]
  $region34: #{tpu_custom_call.1} parent=0
    _
  %s6 = ssub.s32 1, %s4
  %s7 = scalar_select 0, %s6, %s4
  $region1: #{tpu_custom_call.1} parent=0
    #allocation2 [shape = 'u8[4096]{0}', space=vmem, size = 0x1000, scoped, tag = 'input window, operand 0, single buffered']
    #allocation3 [shape = 's32[1]{0}', space=sflag, size = 0x4, scoped, tag = 'scoped memory for tpu_custom_call.1']
    #allocation4 [shape = 's32[1]{0}', space=sflag, size = 0x4, scoped, tag = 'scoped memory for tpu_custom_call.1']
    #allocation5 [shape = 'u8[131072]{0}', space=vmem, size = 0x20000, scoped, tag = 'input window, operand 1, single buffered']
    #allocation6 [shape = 's32[1]{0}', space=sflag, size = 0x4, scoped, tag = 'scoped memory for tpu_custom_call.1']
    #allocation7 [shape = 'u8[8192]{0}', space=vmem, size = 0x2000, scoped, tag = 'input window, operand 2, single buffered']
    #allocation8 [shape = 'u8[4096]{0}', space=vmem, size = 0x1000, scoped, tag = 'output window, operand 0, single buffered']
    %8 = vsyncpa [#allocation3], 0
    %9 = vsyncpa [#allocation6], 0
    %10 = vsyncpa [#allocation4], 0
    // Predicated region
    $region2: #{tpu_custom_call.1} parent=1 // pred_check
      _
    $region3: #{tpu_custom_call.1} parent=1 // pred_check_branch
      %12 = sbr.rel (0) target = $region5
    $region4: #{tpu_custom_call.1} parent=1 // pred_region
      %s14 = ssub.s32 128, 128
      %15 = vsyncadd [#allocation3], %s14
      %s17 = sshll.u32 [#allocation2], 4
      %s18 = int_to_ptr.vmem [resolvable:$true] %s17
      %20 = dma.hbm_to_vmem [thread:$0]  %s0, 128, %s18, [#allocation3]
    $region5: #{tpu_custom_call.1} parent=1 // pred_fallthru
      _
    // Predicated region
    $region6: #{tpu_custom_call.1} parent=1 // pred_check
      _
    $region7: #{tpu_custom_call.1} parent=1 // pred_check_branch
      %22 = sbr.rel (0) target = $region9
    $region8: #{tpu_custom_call.1} parent=1 // pred_region
      %s24 = ssub.s32 4096, 4096
      %25 = vsyncadd [#allocation6], %s24
      %s26 = sshll.u32 [#allocation5], 4
      %s27 = int_to_ptr.vmem [resolvable:$true] %s26
      %32 = dma.hbm_to_vmem [thread:$0]  %s1, 4096, %s27, [#allocation6], 128, 128, 8
    $region9: #{tpu_custom_call.1} parent=1 // pred_fallthru
      _
    // Predicated region
    $region10: #{tpu_custom_call.1} parent=1 // pred_check
      _
    $region11: #{tpu_custom_call.1} parent=1 // pred_check_branch
      %34 = sbr.rel (0) target = $region13
    $region12: #{tpu_custom_call.1} parent=1 // pred_region
      %s36 = ssub.s32 256, 256
      %37 = vsyncadd [#allocation6], %s36
      %s38 = sshll.u32 [#allocation7], 4
      %s39 = int_to_ptr.vmem [resolvable:$true] %s38
      %44 = dma.hbm_to_vmem [thread:$0]  %s2, 256, %s39, [#allocation6], 128, 128, 8
    $region13: #{tpu_custom_call.1} parent=1 // pred_fallthru
      _
    // Predicated region
    $region14: #{tpu_custom_call.1} parent=1 // pred_check
      _
    $region15: #{tpu_custom_call.1} parent=1 // pred_check_branch
      %46 = sbr.rel (0) target = $region17
    $region16: #{tpu_custom_call.1} parent=1 // pred_region
      %47 = dma.done [#allocation3], 128
    $region17: #{tpu_custom_call.1} parent=1 // pred_fallthru
      _
    // Predicated region
    $region18: #{tpu_custom_call.1} parent=1 // pred_check
      _
    $region19: #{tpu_custom_call.1} parent=1 // pred_check_branch
      %49 = sbr.rel (0) target = $region21
    $region20: #{tpu_custom_call.1} parent=1 // pred_region
      %50 = dma.done [#allocation6], 4096
    $region21: #{tpu_custom_call.1} parent=1 // pred_fallthru
      _
    // Predicated region
    $region22: #{tpu_custom_call.1} parent=1 // pred_check
      _
    $region23: #{tpu_custom_call.1} parent=1 // pred_check_branch
      %52 = sbr.rel (0) target = $region25
    $region24: #{tpu_custom_call.1} parent=1 // pred_region
      %53 = dma.done [#allocation6], 256
    $region25: #{tpu_custom_call.1} parent=1 // pred_fallthru
      _
    %v54 = vld [vmem:[#allocation2] sm:$0xff]
    %v55 = vld [vmem:[#allocation5] sm:$0xff]
    %v56 = vld [vmem:[#allocation5 + $0x8] sm:$0xff]
    %v57 = vld [vmem:[#allocation5 + $0x10] sm:$0xff]
    %v58 = vld [vmem:[#allocation5 + $0x18] sm:$0xff]
    %v59 = vld [vmem:[#allocation5 + $0x20] sm:$0xff]
    %v60 = vld [vmem:[#allocation5 + $0x28] sm:$0xff]
    %v61 = vld [vmem:[#allocation5 + $0x30] sm:$0xff]
    %v62 = vld [vmem:[#allocation5 + $0x38] sm:$0xff]
    %v63 = vld [vmem:[#allocation5 + $0x40] sm:$0xff]
    %v64 = vld [vmem:[#allocation5 + $0x48] sm:$0xff]
    %v65 = vld [vmem:[#allocation5 + $0x50] sm:$0xff]
    %v66 = vld [vmem:[#allocation5 + $0x58] sm:$0xff]
    %v67 = vld [vmem:[#allocation5 + $0x60] sm:$0xff]
    %v68 = vld [vmem:[#allocation5 + $0x68] sm:$0xff]
    %v69 = vld [vmem:[#allocation5 + $0x70] sm:$0xff]
    %v70 = vld [vmem:[#allocation5 + $0x78] sm:$0xff]
    %v71 = vld [vmem:[#allocation5 + $0x80] sm:$0xff]
    %v72 = vld [vmem:[#allocation5 + $0x88] sm:$0xff]
    %v73 = vld [vmem:[#allocation5 + $0x90] sm:$0xff]
    %v74 = vld [vmem:[#allocation5 + $0x98] sm:$0xff]
    %v75 = vld [vmem:[#allocation5 + $0xa0] sm:$0xff]
    %v76 = vld [vmem:[#allocation5 + $0xa8] sm:$0xff]
    %v77 = vld [vmem:[#allocation5 + $0xb0] sm:$0xff]
    %v78 = vld [vmem:[#allocation5 + $0xb8] sm:$0xff]
    %v79 = vld [vmem:[#allocation5 + $0xc0] sm:$0xff]
    %v80 = vld [vmem:[#allocation5 + $0xc8] sm:$0xff]
    %v81 = vld [vmem:[#allocation5 + $0xd0] sm:$0xff]
    %v82 = vld [vmem:[#allocation5 + $0xd8] sm:$0xff]
    %v83 = vld [vmem:[#allocation5 + $0xe0] sm:$0xff]
    %v84 = vld [vmem:[#allocation5 + $0xe8] sm:$0xff]
    %v85 = vld [vmem:[#allocation5 + $0xf0] sm:$0xff]
    %v86 = vld [vmem:[#allocation5 + $0xf8] sm:$0xff]
    %v87 = vld [vmem:[#allocation7] sm:$0x1]
    %v88 = vld [vmem:[#allocation7 + $0x1] sm:$0x1]
    %v89 = vld [vmem:[#allocation7 + $0x2] sm:$0x1]
    %v90 = vld [vmem:[#allocation7 + $0x3] sm:$0x1]
    %v91 = vld [vmem:[#allocation7 + $0x4] sm:$0x1]
    %v92 = vld [vmem:[#allocation7 + $0x5] sm:$0x1]
    %v93 = vld [vmem:[#allocation7 + $0x6] sm:$0x1]
    %v94 = vld [vmem:[#allocation7 + $0x7] sm:$0x1]
    %v95 = vld [vmem:[#allocation7 + $0x8] sm:$0x1]
    %v96 = vld [vmem:[#allocation7 + $0x9] sm:$0x1]
    %v97 = vlaneseq
    %v98 = vshrl.u32 %v97, 7
    %v99 = vsub.s32 0, %v98
    %v100 = vrot.slane %v87, %v99
    %101 = vmatprep.subr.mxu0 0.0
    %102 = vmatpush1.msra.mxu0 %v55
    %103 = vmatprep.subr.mxu0 0.0
    %104 = vmatpush1.msra.mxu0 %v56
    %105 = vmatprep.subr.mxu0 0.0
    %106 = vmatpush1.msra.mxu0 %v57
    %107 = vmatprep.subr.mxu0 0.0
    %108 = vmatpush1.msra.mxu0 %v58
    %109 = vmatprep.subr.mxu0 0.0
    %110 = vmatpush1.msra.mxu0 %v59
    %111 = vmatprep.subr.mxu0 0.0
    %112 = vmatpush1.msra.mxu0 %v60
    %113 = vmatprep.subr.mxu0 0.0
    %114 = vmatpush1.msra.mxu0 %v61
    %115 = vmatprep.subr.mxu0 0.0
    %116 = vmatpush1.msra.mxu0 %v62
    %117 = vmatprep.subr.mxu0 0.0
    %118 = vmatpush1.msra.mxu0 %v63
    %119 = vmatprep.subr.mxu0 0.0
    %120 = vmatpush1.msra.mxu0 %v64
    %121 = vmatprep.subr.mxu0 0.0
    %122 = vmatpush1.msra.mxu0 %v65
    %123 = vmatprep.subr.mxu0 0.0
    %124 = vmatpush1.msra.mxu0 %v66
    %125 = vmatprep.subr.mxu0 0.0
    %126 = vmatpush1.msra.mxu0 %v67
    %127 = vmatprep.subr.mxu0 0.0
    %128 = vmatpush1.msra.mxu0 %v68
    %129 = vmatprep.subr.mxu0 0.0
    %130 = vmatpush1.msra.mxu0 %v69
    %131 = vmatprep.subr.mxu0 0.0
    %132 = vmatpush1.msra.mxu0 %v70
    %133 = vmatprep.subr.mxu0 0.0
    %134 = vmatpush1.msra.mxu0 0.0
    %135 = vmatprep.subr.mxu0 0.0
    %136 = vmatpush1.msra.mxu0 0.0
    %137 = vmatprep.subr.mxu0 0.0
    %138 = vmatpush1.msra.mxu0 0.0
    %139 = vmatprep.subr.mxu0 0.0
    %140 = vmatpush1.msra.mxu0 0.0
    %141 = vmatprep.subr.mxu0 0.0
    %142 = vmatpush1.msra.mxu0 0.0
    %143 = vmatprep.subr.mxu0 0.0
    %144 = vmatpush1.msra.mxu0 0.0
    %145 = vmatprep.subr.mxu0 0.0
    %146 = vmatpush1.msra.mxu0 0.0
    %147 = vmatprep.subr.mxu0 0.0
    %148 = vmatpush1.msra.mxu0 0.0
    %149 = vmatprep.subr.mxu0 0.0
    %150 = vmatpush1.msra.mxu0 0.0
    %151 = vmatprep.subr.mxu0 0.0
    %152 = vmatpush1.msra.mxu0 0.0
    %153 = vmatprep.subr.mxu0 0.0
    %154 = vmatpush1.msra.mxu0 0.0
    %155 = vmatprep.subr.mxu0 0.0
    %156 = vmatpush1.msra.mxu0 0.0
    %157 = vmatprep.subr.mxu0 0.0
    %158 = vmatpush1.msra.mxu0 0.0
    %159 = vmatprep.subr.mxu0 0.0
    %160 = vmatpush1.msra.mxu0 0.0
    %161 = vmatprep.subr.mxu0 0.0
    %162 = vmatpush1.msra.mxu0 0.0
    %163 = vmatprep.subr.mxu0 0.0
    %164 = vmatpush1.msra.mxu0 0.0
    %165 = vmatprep.mubr.f32.mxu0 0.0
    %166 = vmatmul.mubr.f32.gmra.mrb[0].mxu0 %v54
    %v167 = vpop.f32.mrb[0].mxu0
    %v168 = vadd.f32 %v100, %v167
    %v169 = vpop.f32.mrb[0].mxu0
    %170 = vdwg.mxu0
    %v171 = vlaneseq
    %v172 = vand.u32 %v171, 127
    %vm173 = vcmp.lt.s32.totalorder %v172, 32
    %174 = vadd.xlane.f32.xlu0 %v168
    %v175 = vpop.xlane.xlu0 %174
    %v176 = vmul.f32 %v175, 0.03125
    %v177 = vsub.f32 %v168, %v176
    %v178 = vsel %vm173, %v177, 0.0
    %v179 = vmul.f32 %v178, %v178
    %180 = vadd.xlane.f32.xlu0 %v179
    %v181 = vpop.xlane.xlu0 %180
    %v182 = vmul.f32 %v181, 0.03125
    %v183 = vadd.f32 %v182, 1e-05
    %v184 = vrsqrt.pop %v183
    %v185 = vmul.f32 %v178, %v184
    %v186 = vlaneseq
    %v187 = vshrl.u32 %v186, 7
    %v188 = vsub.s32 0, %v187
    %v189 = vrot.slane %v88, %v188
    %v190 = vmul.f32 %v185, %v189
    %v191 = vlaneseq
    %v192 = vshrl.u32 %v191, 7
    %v193 = vsub.s32 0, %v192
    %v194 = vrot.slane %v89, %v193
    %v195 = vadd.f32 %v190, %v194
    %v196 = vmax.f32 %v195, 0.0
    %v197 = vlaneseq
    %v198 = vshrl.u32 %v197, 7
    %v199 = vsub.s32 0, %v198
    %v200 = vrot.slane %v90, %v199
    %201 = vmatprep.subr.mxu0 0.0
    %202 = vmatpush1.msra.mxu0 %v71
    %203 = vmatprep.subr.mxu0 0.0
    %204 = vmatpush1.msra.mxu0 %v72
    %205 = vmatprep.subr.mxu0 0.0
    %206 = vmatpush1.msra.mxu0 %v73
    %207 = vmatprep.subr.mxu0 0.0
    %208 = vmatpush1.msra.mxu0 %v74
    %209 = vmatprep.subr.mxu0 0.0
    %210 = vmatpush1.msra.mxu0 %v75
    %211 = vmatprep.subr.mxu0 0.0
    %212 = vmatpush1.msra.mxu0 %v76
    %213 = vmatprep.subr.mxu0 0.0
    %214 = vmatpush1.msra.mxu0 %v77
    %215 = vmatprep.subr.mxu0 0.0
    %216 = vmatpush1.msra.mxu0 %v78
    %217 = vmatprep.subr.mxu0 0.0
    %218 = vmatpush1.msra.mxu0 %v79
    %219 = vmatprep.subr.mxu0 0.0
    %220 = vmatpush1.msra.mxu0 %v80
    %221 = vmatprep.subr.mxu0 0.0
    %222 = vmatpush1.msra.mxu0 %v81
    %223 = vmatprep.subr.mxu0 0.0
    %224 = vmatpush1.msra.mxu0 %v82
    %225 = vmatprep.subr.mxu0 0.0
    %226 = vmatpush1.msra.mxu0 %v83
    %227 = vmatprep.subr.mxu0 0.0
    %228 = vmatpush1.msra.mxu0 %v84
    %229 = vmatprep.subr.mxu0 0.0
    %230 = vmatpush1.msra.mxu0 %v85
    %231 = vmatprep.subr.mxu0 0.0
    %232 = vmatpush1.msra.mxu0 %v86
    %233 = vmatprep.subr.mxu0 0.0
    %234 = vmatpush1.msra.mxu0 0.0
    %235 = vmatprep.subr.mxu0 0.0
    %236 = vmatpush1.msra.mxu0 0.0
    %237 = vmatprep.subr.mxu0 0.0
    %238 = vmatpush1.msra.mxu0 0.0
    %239 = vmatprep.subr.mxu0 0.0
    %240 = vmatpush1.msra.mxu0 0.0
    %241 = vmatprep.subr.mxu0 0.0
    %242 = vmatpush1.msra.mxu0 0.0
    %243 = vmatprep.subr.mxu0 0.0
    %244 = vmatpush1.msra.mxu0 0.0
    %245 = vmatprep.subr.mxu0 0.0
    %246 = vmatpush1.msra.mxu0 0.0
    %247 = vmatprep.subr.mxu0 0.0
    %248 = vmatpush1.msra.mxu0 0.0
    %249 = vmatprep.subr.mxu0 0.0
    %250 = vmatpush1.msra.mxu0 0.0
    %251 = vmatprep.subr.mxu0 0.0
    %252 = vmatpush1.msra.mxu0 0.0
    %253 = vmatprep.subr.mxu0 0.0
    %254 = vmatpush1.msra.mxu0 0.0
    %255 = vmatprep.subr.mxu0 0.0
    %256 = vmatpush1.msra.mxu0 0.0
    %257 = vmatprep.subr.mxu0 0.0
    %258 = vmatpush1.msra.mxu0 0.0
    %259 = vmatprep.subr.mxu0 0.0
    %260 = vmatpush1.msra.mxu0 0.0
    %261 = vmatprep.subr.mxu0 0.0
    %262 = vmatpush1.msra.mxu0 0.0
    %263 = vmatprep.subr.mxu0 0.0
    %264 = vmatpush1.msra.mxu0 0.0
    %265 = vmatprep.mubr.f32.mxu0 0.0
    %266 = vmatmul.mubr.f32.gmra.mrb[0].mxu0 %v196
    %v267 = vpop.f32.mrb[0].mxu0
    %v268 = vadd.f32 %v200, %v267
    %v269 = vpop.f32.mrb[0].mxu0
    %270 = vdwg.mxu0
    %vm271 = vcmp.lt.s32.totalorder %v172, 64
    %272 = vadd.xlane.f32.xlu0 %v268
    %v273 = vpop.xlane.xlu0 %272
    %v274 = vmul.f32 %v273, 0.015625
    %v275 = vsub.f32 %v268, %v274
    %v276 = vsel %vm271, %v275, 0.0
    %v277 = vmul.f32 %v276, %v276
    %278 = vadd.xlane.f32.xlu0 %v277
    %v279 = vpop.xlane.xlu0 %278
    %v280 = vmul.f32 %v279, 0.015625
    %v281 = vadd.f32 %v280, 1e-05
    %v282 = vrsqrt.pop %v281
    %v283 = vmul.f32 %v276, %v282
    %v284 = vlaneseq
    %v285 = vshrl.u32 %v284, 7
    %v286 = vsub.s32 0, %v285
    %v287 = vrot.slane %v91, %v286
    %v288 = vmul.f32 %v283, %v287
    %v289 = vlaneseq
    %v290 = vshrl.u32 %v289, 7
    %v291 = vsub.s32 0, %v290
    %v292 = vrot.slane %v92, %v291
    %v293 = vadd.f32 %v288, %v292
    %295 = vset.pattern.permute.xlu0 8
    %296 = vperm.xlu0 %295, %v54
    %v297 = vpop.permute.xlu0 %296
    %v299 = vlaneseq
    %v300 = vshrl.u32 %v299, 7
    %v301 = vsub.s32 0, %v300
    %v302 = vrot.slane %v93, %v301
    %v303 = vmul.f32 %v297, %v302
    %v304 = vlaneseq
    %v305 = vshrl.u32 %v304, 7
    %v306 = vsub.s32 0, %v305
    %v307 = vrot.slane %v94, %v306
    %v308 = vadd.f32 %v303, %v307
    %v309 = vmax.f32 %v308, 0.0
    %v310 = vadd.f32 %v293, %v309
    %v311 = vmax.f32 %v310, 0.0
    %v312 = vlaneseq
    %v313 = vshrl.u32 %v312, 7
    %v314 = vsub.s32 0, %v313
    %v315 = vrot.slane %v95, %v314
    %v316 = vmul.f32 %v311, %v315
    %317 = vadd.xlane.f32.xlu0 %v316
    %v318 = vpop.xlane.xlu0 %317
    %v319 = vlaneseq
    %v320 = vshrl.u32 %v319, 7
    %v321 = vsub.s32 0, %v320
    %v322 = vrot.slane %v96, %v321
    %v323 = vadd.f32 %v318, %v322
    %324 = vst [vmem:[#allocation8] sm:$0xff] %v323
    // Predicated region
    $region26: #{tpu_custom_call.1} parent=1 // pred_check
      _
    $region27: #{tpu_custom_call.1} parent=1 // pred_check_branch
      %326 = sbr.rel (0) target = $region29
    $region28: #{tpu_custom_call.1} parent=1 // pred_region
      %s328 = ssub.s32 128, 128
      %329 = vsyncadd [#allocation4], %s328
      %s331 = sshll.u32 [#allocation8], 4
      %s332 = int_to_ptr.vmem [resolvable:$true] %s331
      %334 = dma.vmem_to_hbm [thread:$0]  %s332, 128, %s3, [#allocation4]
    $region29: #{tpu_custom_call.1} parent=1 // pred_fallthru
      _
    // Predicated region
    $region30: #{tpu_custom_call.1} parent=1 // pred_check
      _
    $region31: #{tpu_custom_call.1} parent=1 // pred_check_branch
      %336 = sbr.rel (0) target = $region33
    $region32: #{tpu_custom_call.1} parent=1 // pred_region
      %337 = dma.done [#allocation4], 128
    $region33: #{tpu_custom_call.1} parent=1 // pred_fallthru
      _
    %338 = vsyncpa [#allocation3], 1
    %339 = vsyncpa [#allocation6], 1
    %340 = vsyncpa [#allocation4], 1

</llo_original>
